<compile_context>
chip_gen: v7x
topology: tpu7x:2x2x1
jax: 0.10.0
libtpu: 0.0.40
codegen_flags: <defaults>
</compile_context>

<pallas_src>
import functools

import jax
import jax.numpy as jnp
from jax.experimental import pallas as pl
from jax.experimental.pallas import tpu as pltpu

EPS = 1e-10
LANE = 128


def _round_up(x, m):
    return (x + m - 1) // m * m


def _sum_all(v):
    """Full reduction of a 2-D (sublane, lane) tile to shape (1, 1)."""
    return jnp.sum(jnp.sum(v, axis=1, keepdims=True), axis=0, keepdims=True)


def _dice_focal_partial_kernel(hw, masked,
                               pred_ref, ann_ref,
                               inter_ref, psum_ref, osum_ref, fsum_ref):
    """Grid = (B, n_spatial_tiles).

    pred block: (1, C, T)  -- classes on sublanes, pixels on lanes.
    ann  block: (1, 1, T)  -- lane-dense int32 labels.

    Per-batch resident accumulators (each a (1, 1, 128) block):
      inter = sum_px sum_c softmax(q)*onehot      (dice numerator / 2)
      psum  = sum_px sum_c softmax(q)             (dice denominator term)
      osum  = sum_px sum_c onehot                 (dice denominator term)
      fsum  = sum_px -(1-pt)^2 * log(pt)          (focal, gamma=2, pre-mean)
    where q = softmax(pred) + eps.
    """
    si = pl.program_id(1)

    x = pred_ref[0].astype(jnp.float32)      # (C, T) logits (bf16 inputs upcast here)
    labels = ann_ref[0]                      # (1, T) int32
    c, t = x.shape

    # --- first softmax over the class (sublane) axis: q = softmax(pred) + eps ---
    m1 = jnp.max(x, axis=0, keepdims=True)
    e1 = jnp.exp(x - m1)
    s1 = jnp.sum(e1, axis=0, keepdims=True)
    q = e1 * pl.reciprocal(s1, approx=False) + EPS

    # --- DiceLoss / FocalLoss both re-normalize q over the class axis ---
    m2 = jnp.max(q, axis=0, keepdims=True)
    z = q - m2
    e2 = jnp.exp(z)
    s2 = jnp.sum(e2, axis=0, keepdims=True)
    p2 = e2 * pl.reciprocal(s2, approx=False)     # softmax(q)      -> dice
    logp2 = z - jnp.log(s2)                       # log_softmax(q)  -> focal

    # --- one-hot of labels along the class (sublane) axis ---
    cls = jax.lax.broadcasted_iota(jnp.int32, (c, t), 0)
    onehot = jnp.where(cls == labels, 1.0, 0.0)

    if masked:  # static flag: only emitted when H*W was padded up to the tile size
        pix = jax.lax.broadcasted_iota(jnp.int32, (1, t), 1) + si * t
        valid = (pix < hw).astype(jnp.float32)
        onehot = onehot * valid
        psum11 = _sum_all(p2 * valid)
    else:
        psum11 = _sum_all(p2)

    inter11 = _sum_all(p2 * onehot)
    osum11 = _sum_all(onehot)

    # --- focal (gamma = 2): gather log p at the label via the one-hot ---
    logpt = jnp.sum(logp2 * onehot, axis=0, keepdims=True)   # (1, T); 0 for padded px
    pt = jnp.exp(logpt)
    one_m_pt = 1.0 - pt
    fsum11 = _sum_all(-(one_m_pt * one_m_pt) * logpt)        # padded px contribute 0

    lanes = inter_ref.shape[-1]

    def _row(v11):
        return jnp.broadcast_to(jnp.reshape(v11, (1, 1, 1)), (1, 1, lanes))

    @pl.when(si == 0)
    def _():
        inter_ref[...] = jnp.zeros_like(inter_ref)
        psum_ref[...] = jnp.zeros_like(psum_ref)
        osum_ref[...] = jnp.zeros_like(osum_ref)
        fsum_ref[...] = jnp.zeros_like(fsum_ref)

    inter_ref[...] += _row(inter11)
    psum_ref[...] += _row(psum11)
    osum_ref[...] += _row(osum11)
    fsum_ref[...] += _row(fsum11)


def _pick_tile(hw, c, pred_itemsize):
    """Largest multiple-of-128 spatial tile keeping the double-buffered input
    footprint ~<= 8 MiB (portable across v5e / v6e / v7x VMEM sizes)."""
    bytes_per_pix = c * pred_itemsize + 4            # pred + int32 labels
    budget = 8 * 1024 * 1024
    by_vmem = max(LANE, (budget // (2 * bytes_per_pix)) // LANE * LANE)
    return int(min(4096, by_vmem, _round_up(hw, LANE)))


@jax.jit
def dice_focal(pred, ann):
    """pred: (B, C, H, W) logits (NCHW, consumed natively); ann: (B, H, W) labels.
    Returns (B,) float32 matching DiceFocal.forward."""
    B, C, H, W = pred.shape
    HW = H * W

    # Keep bf16 inputs in bf16 for the DMA; cast to f32 inside the kernel.
    if pred.dtype not in (jnp.float32, jnp.bfloat16):
        pred = pred.astype(jnp.float32)
    pred_r = pred.reshape(B, C, HW)                    # free reshape, no transpose
    ann_r = ann.astype(jnp.int32).reshape(B, 1, HW)
    # TODO(synk): labels could be narrowed to int8 when C <= 127 for extra HBM savings.

    tile = _pick_tile(HW, C, jnp.dtype(pred_r.dtype).itemsize)
    hw_pad = _round_up(HW, tile)
    masked = hw_pad != HW
    if masked:
        pred_r = jnp.pad(pred_r, ((0, 0), (0, 0), (0, hw_pad - HW)))
        ann_r = jnp.pad(ann_r, ((0, 0), (0, 0), (0, hw_pad - HW)), constant_values=C)

    n_s = hw_pad // tile
    out_sd = jax.ShapeDtypeStruct((B, 1, LANE), jnp.float32)
    kernel = functools.partial(_dice_focal_partial_kernel, HW, masked)

    inter, psum, osum, fsum = pl.pallas_call(
        kernel,
        out_shape=(out_sd, out_sd, out_sd, out_sd),
        grid_spec=pltpu.PrefetchScalarGridSpec(
            num_scalar_prefetch=0,
            grid=(B, n_s),
            in_specs=[
                pl.BlockSpec((1, C, tile), lambda b, s: (b, 0, s)),
                pl.BlockSpec((1, 1, tile), lambda b, s: (b, 0, s)),
            ],
            out_specs=tuple(
                pl.BlockSpec((1, 1, LANE), lambda b, s: (b, 0, 0)) for _ in range(4)
            ),
        ),
        compiler_params=pltpu.CompilerParams(
            dimension_semantics=("parallel", "arbitrary"),
            vmem_limit_bytes=32 * 1024 * 1024,
        ),
    )(pred_r, ann_r)

    inter_b = inter[:, 0, 0]
    psum_b = psum[:, 0, 0]
    osum_b = osum[:, 0, 0]
    fsum_b = fsum[:, 0, 0]

    dice = 1.0 - (2.0 * inter_b) / (osum_b + psum_b + EPS)   # DiceLoss, (B,)
    focal = jnp.sum(fsum_b) / (B * HW)                       # FocalLoss mean, scalar
    return dice + focal


def dice_focal_ref(pred, ann):
    """Pure-JAX reference mirroring the PyTorch DiceFocal module."""
    B, C, H, W = pred.shape
    q = jax.nn.softmax(pred.astype(jnp.float32), axis=1) + EPS
    # DiceLoss(q, ann): softmaxes q again over the class dim.
    p2 = jax.nn.softmax(q, axis=1)
    onehot = jax.nn.one_hot(ann.astype(jnp.int32), C, axis=1, dtype=jnp.float32)
    num = 2.0 * jnp.sum(p2 * onehot, axis=(1, 2, 3))
    denom = jnp.sum(onehot, axis=(1, 2, 3)) + jnp.sum(p2, axis=(1, 2, 3)) + EPS
    dice = 1.0 - num / denom
    # FocalLoss(gamma=2, no alpha, mean): log_softmax over the class dim of q.
    logp2 = jax.nn.log_softmax(q, axis=1)
    logpt = jnp.take_along_axis(logp2, ann[:, None].astype(jnp.int32), axis=1)[:, 0]
    pt = jnp.exp(logpt)
    focal = jnp.mean(-((1.0 - pt) ** 2) * logpt)
    return dice + focal


if __name__ == "__main__":
    key = jax.random.PRNGKey(0)
    kp, ka = jax.random.split(key)
    B, C, H, W = 2, 4, 16, 16
    pred = jax.random.normal(kp, (B, C, H, W), dtype=jnp.float32)
    ann = jax.random.randint(ka, (B, H, W), 0, C, dtype=jnp.int32)

    out = dice_focal(pred, ann)
    out = jax.block_until_ready(out)

    ref = dice_focal_ref(pred, ann)
    assert out.shape == (B,)
    assert jnp.allclose(out, ref, rtol=1e-4, atol=1e-5), (out, ref)
    print("KERNEL_OK")
</pallas_src>

<mosaic_0001>
module attributes {stable_mosaic.version = 11 : i64} {
  func.func @_dice_focal_partial_kernel(%arg0: i32, %arg1: i32, %arg2: memref<1x4x256xf32, #tpu.memory_space<vmem>>, %arg3: memref<1x1x256xi32, #tpu.memory_space<vmem>>, %arg4: memref<1x1x128xf32, #tpu.memory_space<vmem>>, %arg5: memref<1x1x128xf32, #tpu.memory_space<vmem>>, %arg6: memref<1x1x128xf32, #tpu.memory_space<vmem>>, %arg7: memref<1x1x128xf32, #tpu.memory_space<vmem>>) attributes {dimension_semantics = [#tpu.dimension_semantics<parallel>, #tpu.dimension_semantics<arbitrary>], iteration_bounds = array<i64: 2, 1>, scalar_prefetch = 0 : i64, scratch_operands = 0 : i64, tpu.core_type = #tpu.core_type<tc>, window_params = [{transform_indices = @transform_0, window_bounds = array<i64: 1, 4, 256>}, {transform_indices = @transform_1, window_bounds = array<i64: 1, 1, 256>}, {transform_indices = @transform_2, window_bounds = array<i64: 1, 1, 128>}, {transform_indices = @transform_3, window_bounds = array<i64: 1, 1, 128>}, {transform_indices = @transform_4, window_bounds = array<i64: 1, 1, 128>}, {transform_indices = @transform_5, window_bounds = array<i64: 1, 1, 128>}]} {
    %c0 = arith.constant 0 : index
    %c0_0 = arith.constant 0 : index
    %c0_1 = arith.constant 0 : index
    %0 = vector.load %arg2[%c0, %c0_0, %c0_1] : memref<1x4x256xf32, #tpu.memory_space<vmem>>, vector<1x4x256xf32>
    %1 = vector.shape_cast %0 : vector<1x4x256xf32> to vector<4x256xf32>
    %c0_2 = arith.constant 0 : index
    %c0_3 = arith.constant 0 : index
    %c0_4 = arith.constant 0 : index
    %2 = vector.load %arg3[%c0_2, %c0_3, %c0_4] : memref<1x1x256xi32, #tpu.memory_space<vmem>>, vector<1x1x256xi32>
    %3 = vector.shape_cast %2 : vector<1x1x256xi32> to vector<1x256xi32>
    %cst = arith.constant dense<0xFF800000> : vector<256xf32>
    %4 = vector.multi_reduction <maximumf>, %1, %cst [0] : vector<4x256xf32> to vector<256xf32>
    %5 = vector.shape_cast %4 : vector<256xf32> to vector<1x256xf32>
    %6 = vector.broadcast %5 : vector<1x256xf32> to vector<4x256xf32>
    %7 = arith.subf %1, %6 : vector<4x256xf32>
    %8 = math.exp %7 : vector<4x256xf32>
    %cst_5 = arith.constant dense<0.000000e+00> : vector<256xf32>
    %9 = vector.multi_reduction <add>, %8, %cst_5 [0] : vector<4x256xf32> to vector<256xf32>
    %10 = vector.shape_cast %9 : vector<256xf32> to vector<1x256xf32>
    %11 = tpu.reciprocal %10 : vector<1x256xf32> -> vector<1x256xf32>
    %12 = vector.broadcast %11 : vector<1x256xf32> to vector<4x256xf32>
    %13 = arith.mulf %8, %12 : vector<4x256xf32>
    %cst_6 = arith.constant 1.000000e-10 : f32
    %14 = vector.broadcast %cst_6 : f32 to vector<4x256xf32>
    %15 = arith.addf %13, %14 : vector<4x256xf32>
    %cst_7 = arith.constant dense<0xFF800000> : vector<256xf32>
    %16 = vector.multi_reduction <maximumf>, %15, %cst_7 [0] : vector<4x256xf32> to vector<256xf32>
    %17 = vector.shape_cast %16 : vector<256xf32> to vector<1x256xf32>
    %18 = vector.broadcast %17 : vector<1x256xf32> to vector<4x256xf32>
    %19 = arith.subf %15, %18 : vector<4x256xf32>
    %20 = math.exp %19 : vector<4x256xf32>
    %cst_8 = arith.constant dense<0.000000e+00> : vector<256xf32>
    %21 = vector.multi_reduction <add>, %20, %cst_8 [0] : vector<4x256xf32> to vector<256xf32>
    %22 = vector.shape_cast %21 : vector<256xf32> to vector<1x256xf32>
    %23 = tpu.reciprocal %22 : vector<1x256xf32> -> vector<1x256xf32>
    %24 = vector.broadcast %23 : vector<1x256xf32> to vector<4x256xf32>
    %25 = arith.mulf %20, %24 : vector<4x256xf32>
    %26 = math.log %22 : vector<1x256xf32>
    %27 = vector.broadcast %26 : vector<1x256xf32> to vector<4x256xf32>
    %28 = arith.subf %19, %27 : vector<4x256xf32>
    %29 = tpu.iota {dimensions = array<i32: 0>} : vector<4x256xi32>
    %30 = vector.broadcast %3 : vector<1x256xi32> to vector<4x256xi32>
    %31 = arith.cmpi eq, %29, %30 : vector<4x256xi32>
    %cst_9 = arith.constant 1.000000e+00 : f32
    %cst_10 = arith.constant 0.000000e+00 : f32
    %32 = vector.broadcast %cst_9 : f32 to vector<4x256xf32>
    %33 = vector.broadcast %cst_10 : f32 to vector<4x256xf32>
    %34 = arith.select %31, %32, %33 : vector<4x256xi1>, vector<4x256xf32>
    %cst_11 = arith.constant dense<0.000000e+00> : vector<4xf32>
    %35 = vector.multi_reduction <add>, %25, %cst_11 [1] : vector<4x256xf32> to vector<4xf32>
    %36 = vector.shape_cast %35 : vector<4xf32> to vector<4x1xf32>
    %cst_12 = arith.constant dense<0.000000e+00> : vector<1xf32>
    %37 = vector.multi_reduction <add>, %36, %cst_12 [0] : vector<4x1xf32> to vector<1xf32>
    %38 = vector.shape_cast %37 : vector<1xf32> to vector<1x1xf32>
    %39 = arith.mulf %25, %34 : vector<4x256xf32>
    %cst_13 = arith.constant dense<0.000000e+00> : vector<4xf32>
    %40 = vector.multi_reduction <add>, %39, %cst_13 [1] : vector<4x256xf32> to vector<4xf32>
    %41 = vector.shape_cast %40 : vector<4xf32> to vector<4x1xf32>
    %cst_14 = arith.constant dense<0.000000e+00> : vector<1xf32>
    %42 = vector.multi_reduction <add>, %41, %cst_14 [0] : vector<4x1xf32> to vector<1xf32>
    %43 = vector.shape_cast %42 : vector<1xf32> to vector<1x1xf32>
    %cst_15 = arith.constant dense<0.000000e+00> : vector<4xf32>
    %44 = vector.multi_reduction <add>, %34, %cst_15 [1] : vector<4x256xf32> to vector<4xf32>
    %45 = vector.shape_cast %44 : vector<4xf32> to vector<4x1xf32>
    %cst_16 = arith.constant dense<0.000000e+00> : vector<1xf32>
    %46 = vector.multi_reduction <add>, %45, %cst_16 [0] : vector<4x1xf32> to vector<1xf32>
    %47 = vector.shape_cast %46 : vector<1xf32> to vector<1x1xf32>
    %48 = arith.mulf %28, %34 : vector<4x256xf32>
    %cst_17 = arith.constant dense<0.000000e+00> : vector<256xf32>
    %49 = vector.multi_reduction <add>, %48, %cst_17 [0] : vector<4x256xf32> to vector<256xf32>
    %50 = vector.shape_cast %49 : vector<256xf32> to vector<1x256xf32>
    %51 = math.exp %50 : vector<1x256xf32>
    %cst_18 = arith.constant 1.000000e+00 : f32
    %52 = vector.broadcast %cst_18 : f32 to vector<1x256xf32>
    %53 = arith.subf %52, %51 : vector<1x256xf32>
    %54 = arith.mulf %53, %53 : vector<1x256xf32>
    %cst_19 = arith.constant 0.000000e+00 : f32
    %55 = vector.broadcast %cst_19 : f32 to vector<1x256xf32>
    %56 = arith.subf %55, %54 : vector<1x256xf32>
    %57 = arith.mulf %56, %50 : vector<1x256xf32>
    %cst_20 = arith.constant dense<0.000000e+00> : vector<1xf32>
    %58 = vector.multi_reduction <add>, %57, %cst_20 [1] : vector<1x256xf32> to vector<1xf32>
    %59 = vector.shape_cast %58 : vector<1xf32> to vector<1x1xf32>
    %cst_21 = arith.constant dense<0.000000e+00> : vector<1xf32>
    %60 = vector.multi_reduction <add>, %59, %cst_21 [0] : vector<1x1xf32> to vector<1xf32>
    %61 = vector.shape_cast %60 : vector<1xf32> to vector<1x1xf32>
    %c0_i32 = arith.constant 0 : i32
    %62 = arith.cmpi eq, %arg1, %c0_i32 : i32
    %63 = arith.extui %62 : i1 to i32
    %c0_i32_22 = arith.constant 0 : i32
    %64 = arith.cmpi ne, %63, %c0_i32_22 : i32
    scf.if %64 {
      %cst_47 = arith.constant 0.000000e+00 : f32
      %89 = vector.broadcast %cst_47 : f32 to vector<1x1x128xf32>
      %c0_48 = arith.constant 0 : index
      %c0_49 = arith.constant 0 : index
      %c0_50 = arith.constant 0 : index
      %90 = vector.load %arg4[%c0_48, %c0_49, %c0_50] : memref<1x1x128xf32, #tpu.memory_space<vmem>>, vector<1x1x128xf32>
      tpu.vector_store %arg4[%c0_48, %c0_49, %c0_50], %89 {strides = array<i32>} : memref<1x1x128xf32, #tpu.memory_space<vmem>>, vector<1x1x128xf32>,
      %cst_51 = arith.constant 0.000000e+00 : f32
      %91 = vector.broadcast %cst_51 : f32 to vector<1x1x128xf32>
      %c0_52 = arith.constant 0 : index
      %c0_53 = arith.constant 0 : index
      %c0_54 = arith.constant 0 : index
      %92 = vector.load %arg5[%c0_52, %c0_53, %c0_54] : memref<1x1x128xf32, #tpu.memory_space<vmem>>, vector<1x1x128xf32>
      tpu.vector_store %arg5[%c0_52, %c0_53, %c0_54], %91 {strides = array<i32>} : memref<1x1x128xf32, #tpu.memory_space<vmem>>, vector<1x1x128xf32>,
      %cst_55 = arith.constant 0.000000e+00 : f32
      %93 = vector.broadcast %cst_55 : f32 to vector<1x1x128xf32>
      %c0_56 = arith.constant 0 : index
      %c0_57 = arith.constant 0 : index
      %c0_58 = arith.constant 0 : index
      %94 = vector.load %arg6[%c0_56, %c0_57, %c0_58] : memref<1x1x128xf32, #tpu.memory_space<vmem>>, vector<1x1x128xf32>
      tpu.vector_store %arg6[%c0_56, %c0_57, %c0_58], %93 {strides = array<i32>} : memref<1x1x128xf32, #tpu.memory_space<vmem>>, vector<1x1x128xf32>,
      %cst_59 = arith.constant 0.000000e+00 : f32
      %95 = vector.broadcast %cst_59 : f32 to vector<1x1x128xf32>
      %c0_60 = arith.constant 0 : index
      %c0_61 = arith.constant 0 : index
      %c0_62 = arith.constant 0 : index
      %96 = vector.load %arg7[%c0_60, %c0_61, %c0_62] : memref<1x1x128xf32, #tpu.memory_space<vmem>>, vector<1x1x128xf32>
      tpu.vector_store %arg7[%c0_60, %c0_61, %c0_62], %95 {strides = array<i32>} : memref<1x1x128xf32, #tpu.memory_space<vmem>>, vector<1x1x128xf32>,
    } else {
    }
    %c0_23 = arith.constant 0 : index
    %c0_24 = arith.constant 0 : index
    %c0_25 = arith.constant 0 : index
    %65 = vector.load %arg4[%c0_23, %c0_24, %c0_25] : memref<1x1x128xf32, #tpu.memory_space<vmem>>, vector<1x1x128xf32>
    %66 = vector.shape_cast %43 : vector<1x1xf32> to vector<1x1x1xf32>
    %67 = vector.shape_cast %66 : vector<1x1x1xf32> to vector<1x1x1xf32>
    %68 = vector.broadcast %67 : vector<1x1x1xf32> to vector<1x1x128xf32>
    %69 = arith.addf %65, %68 : vector<1x1x128xf32>
    %c0_26 = arith.constant 0 : index
    %c0_27 = arith.constant 0 : index
    %c0_28 = arith.constant 0 : index
    %70 = vector.load %arg4[%c0_26, %c0_27, %c0_28] : memref<1x1x128xf32, #tpu.memory_space<vmem>>, vector<1x1x128xf32>
    tpu.vector_store %arg4[%c0_26, %c0_27, %c0_28], %69 {strides = array<i32>} : memref<1x1x128xf32, #tpu.memory_space<vmem>>, vector<1x1x128xf32>,
    %c0_29 = arith.constant 0 : index
    %c0_30 = arith.constant 0 : index
    %c0_31 = arith.constant 0 : index
    %71 = vector.load %arg5[%c0_29, %c0_30, %c0_31] : memref<1x1x128xf32, #tpu.memory_space<vmem>>, vector<1x1x128xf32>
    %72 = vector.shape_cast %38 : vector<1x1xf32> to vector<1x1x1xf32>
    %73 = vector.shape_cast %72 : vector<1x1x1xf32> to vector<1x1x1xf32>
    %74 = vector.broadcast %73 : vector<1x1x1xf32> to vector<1x1x128xf32>
    %75 = arith.addf %71, %74 : vector<1x1x128xf32>
    %c0_32 = arith.constant 0 : index
    %c0_33 = arith.constant 0 : index
    %c0_34 = arith.constant 0 : index
    %76 = vector.load %arg5[%c0_32, %c0_33, %c0_34] : memref<1x1x128xf32, #tpu.memory_space<vmem>>, vector<1x1x128xf32>
    tpu.vector_store %arg5[%c0_32, %c0_33, %c0_34], %75 {strides = array<i32>} : memref<1x1x128xf32, #tpu.memory_space<vmem>>, vector<1x1x128xf32>,
    %c0_35 = arith.constant 0 : index
    %c0_36 = arith.constant 0 : index
    %c0_37 = arith.constant 0 : index
    %77 = vector.load %arg6[%c0_35, %c0_36, %c0_37] : memref<1x1x128xf32, #tpu.memory_space<vmem>>, vector<1x1x128xf32>
    %78 = vector.shape_cast %47 : vector<1x1xf32> to vector<1x1x1xf32>
    %79 = vector.shape_cast %78 : vector<1x1x1xf32> to vector<1x1x1xf32>
    %80 = vector.broadcast %79 : vector<1x1x1xf32> to vector<1x1x128xf32>
    %81 = arith.addf %77, %80 : vector<1x1x128xf32>
    %c0_38 = arith.constant 0 : index
    %c0_39 = arith.constant 0 : index
    %c0_40 = arith.constant 0 : index
    %82 = vector.load %arg6[%c0_38, %c0_39, %c0_40] : memref<1x1x128xf32, #tpu.memory_space<vmem>>, vector<1x1x128xf32>
    tpu.vector_store %arg6[%c0_38, %c0_39, %c0_40], %81 {strides = array<i32>} : memref<1x1x128xf32, #tpu.memory_space<vmem>>, vector<1x1x128xf32>,
    %c0_41 = arith.constant 0 : index
    %c0_42 = arith.constant 0 : index
    %c0_43 = arith.constant 0 : index
    %83 = vector.load %arg7[%c0_41, %c0_42, %c0_43] : memref<1x1x128xf32, #tpu.memory_space<vmem>>, vector<1x1x128xf32>
    %84 = vector.shape_cast %61 : vector<1x1xf32> to vector<1x1x1xf32>
    %85 = vector.shape_cast %84 : vector<1x1x1xf32> to vector<1x1x1xf32>
    %86 = vector.broadcast %85 : vector<1x1x1xf32> to vector<1x1x128xf32>
    %87 = arith.addf %83, %86 : vector<1x1x128xf32>
    %c0_44 = arith.constant 0 : index
    %c0_45 = arith.constant 0 : index
    %c0_46 = arith.constant 0 : index
    %88 = vector.load %arg7[%c0_44, %c0_45, %c0_46] : memref<1x1x128xf32, #tpu.memory_space<vmem>>, vector<1x1x128xf32>
    tpu.vector_store %arg7[%c0_44, %c0_45, %c0_46], %87 {strides = array<i32>} : memref<1x1x128xf32, #tpu.memory_space<vmem>>, vector<1x1x128xf32>,
    return
  }
  func.func @transform_0(%arg0: i32, %arg1: i32) -> (i32, i32, i32) {
    %c0_i32 = arith.constant 0 : i32
    %c0_i32_0 = arith.constant 0 : i32
    return %arg0, %c0_i32, %arg1 : i32, i32, i32
  }
  func.func @transform_1(%arg0: i32, %arg1: i32) -> (i32, i32, i32) {
    %c0_i32 = arith.constant 0 : i32
    %c0_i32_0 = arith.constant 0 : i32
    return %arg0, %c0_i32, %arg1 : i32, i32, i32
  }
  func.func @transform_2(%arg0: i32, %arg1: i32) -> (i32, i32, i32) {
    %c0_i32 = arith.constant 0 : i32
    %c0_i32_0 = arith.constant 0 : i32
    %c0_i32_1 = arith.constant 0 : i32
    return %arg0, %c0_i32, %c0_i32_0 : i32, i32, i32
  }
  func.func @transform_3(%arg0: i32, %arg1: i32) -> (i32, i32, i32) {
    %c0_i32 = arith.constant 0 : i32
    %c0_i32_0 = arith.constant 0 : i32
    %c0_i32_1 = arith.constant 0 : i32
    return %arg0, %c0_i32, %c0_i32_0 : i32, i32, i32
  }
  func.func @transform_4(%arg0: i32, %arg1: i32) -> (i32, i32, i32) {
    %c0_i32 = arith.constant 0 : i32
    %c0_i32_0 = arith.constant 0 : i32
    %c0_i32_1 = arith.constant 0 : i32
    return %arg0, %c0_i32, %c0_i32_0 : i32, i32, i32
  }
  func.func @transform_5(%arg0: i32, %arg1: i32) -> (i32, i32, i32) {
    %c0_i32 = arith.constant 0 : i32
    %c0_i32_0 = arith.constant 0 : i32
    %c0_i32_1 = arith.constant 0 : i32
    return %arg0, %c0_i32, %c0_i32_0 : i32, i32, i32
  }
}

</mosaic_0001>

<llo_original>
// kernel: dice_focal.1
$region0: #{dice_focal.1}
  #allocation0 [shape = 'u32[]', space=smem, size = 0x4, offset = 0x4, fixed_abs, tag = 'smem constant byte address 0x4 - core index']
  #allocation1 [shape = 'u32[144,128]{1,0:T(1,128)}', space=vmem, size = 0x12000, scoped, tag = 'internal scratch']
  %s0 = inlined_call_operand.vmem [shape: f32[2,4,256], index: 0, kind: input, shape index: {}]
  %s1 = inlined_call_operand.vmem [shape: s32[2,1,256], index: 1, kind: input, shape index: {}]
  %s2 = inlined_call_operand.vmem [shape: f32[2,1,128], index: 2, kind: output, shape index: {0}]
  %s3 = inlined_call_operand.vmem [shape: f32[2,1,128], index: 3, kind: output, shape index: {1}]
  %s4 = inlined_call_operand.vmem [shape: f32[2,1,128], index: 4, kind: output, shape index: {2}]
  %s5 = inlined_call_operand.vmem [shape: f32[2,1,128], index: 5, kind: output, shape index: {3}]
  %6 = xla_tuple %s2, %s3, %s4, %s5
  %s7 = sld [smem:[#allocation0]]
  $region69: #{dice_focal.1} parent=0
    _
  %s9 = ssub.s32 1, %s7
  %s10 = scalar_select 0, %s9, %s7
  loop: start=0, step=1, limit=4
  $region2: #{dice_focal.1} parent=0 // loop_pre_header
    _
  $region3: #{dice_focal.1} parent=0 // loop_header
    %s12 = sphi 0, %s16
    %p13 = scmp.ge.s32.totalorder %s12, 4
    %s19 = sphi 0, %s31
    %s20 = sphi 0, %s27
    %s21 = sphi 0, %s19
    %s22 = sphi 0, %s20
    %s23 = sphi 0, %s21
    %s24 = sphi 0, %s22
    %s36 = sphi 0, %s38
    %s39 = sphi 0, %s36
    %s40 = sphi 0, %s39
    %s56 = sphi 0, %s40
    %s64 = sphi 0, %s66
    %s67 = sphi 0, %s64
    %s68 = sphi 0, %s67
    %s84 = sphi 0, %s68
    %s90 = sphi 0, %s92
    %s93 = sphi 0, %s90
    %s94 = sphi 0, %s93
    %s110 = sphi 0, %s94
    %s116 = sphi 0, %s118
    %s119 = sphi 0, %s116
    %s120 = sphi 0, %s119
    %s136 = sphi 0, %s120
    %s142 = sphi 0, %s144
    %s145 = sphi 0, %s142
    %s146 = sphi 0, %s145
    %s162 = sphi 0, %s146
    %s168 = sphi 0, %s170
    %s171 = sphi 0, %s168
    %s172 = sphi 0, %s171
    %s188 = sphi 0, %s172
  $region4: #{dice_focal.1} parent=0 // loop_header_branch
    %15 = sbr.rel (%p13) target = $region8
  $region5: #{dice_focal.1} parent=0 // loop_body
    %s17 = ssub.s32 %s12, 1
    %s18 = ssub.s32 %s12, 2
    %s25 = sadd.s32 1, %s20
    %p26 = scmp.ge.s32.totalorder %s25, 1
    %s27 = scalar_select %p26, 0, %s25
    %s28 = sadd.s32 1, %s19
    %s29 = scalar_select %p26, %s28, %s19
    %p30 = scmp.ge.s32.totalorder %s29, 2
    %s31 = scalar_select %p30, 0, %s29
    %s32 = ssub.s32 %s19, %s31
    %s33 = ssub.s32 %s20, %s27
    %s34 = sor.u32 %s32, %s33
    %p35 = scmp.eq.s32.totalorder %s34, 0
    %s37 = sadd.s32 %s36, 1
    %s38 = scalar_select %p35, %s36, %s37
    %p41 = pneg %p35
    %p42 = scmp.eq.s32.totalorder %s12, 1
    %p43 = por %p41, %p42
    %p44 = scmp.ne.s32.totalorder %s36, %s39
    %p45 = scmp.eq.s32.totalorder %s12, 0
    %p46 = por %p44, %p45
    %p47 = scmp.ne.s32.totalorder %s36, %s39
    %p48 = scmp.eq.s32.totalorder %s17, 1
    %p49 = por %p47, %p48
    %p50 = scmp.ne.s32.totalorder %s39, %s40
    %p51 = scmp.eq.s32.totalorder %s17, 0
    %p52 = por %p50, %p51
    %p53 = scmp.ne.s32.totalorder %s39, %s40
    %p54 = scmp.eq.s32.totalorder %s18, 1
    %p55 = por %p53, %p54
    %p57 = scmp.ne.s32.totalorder %s40, %s56
    %p58 = scmp.eq.s32.totalorder %s18, 0
    %p59 = por %p57, %p58
    %s60 = ssub.s32 %s19, %s31
    %s61 = ssub.s32 %s20, %s27
    %s62 = sor.u32 %s60, %s61
    %p63 = scmp.eq.s32.totalorder %s62, 0
    %s65 = sadd.s32 %s64, 1
    %s66 = scalar_select %p63, %s64, %s65
    %p69 = pneg %p63
    %p70 = scmp.eq.s32.totalorder %s12, 1
    %p71 = por %p69, %p70
    %p72 = scmp.ne.s32.totalorder %s64, %s67
    %p73 = scmp.eq.s32.totalorder %s12, 0
    %p74 = por %p72, %p73
    %p75 = scmp.ne.s32.totalorder %s64, %s67
    %p76 = scmp.eq.s32.totalorder %s17, 1
    %p77 = por %p75, %p76
    %p78 = scmp.ne.s32.totalorder %s67, %s68
    %p79 = scmp.eq.s32.totalorder %s17, 0
    %p80 = por %p78, %p79
    %p81 = scmp.ne.s32.totalorder %s67, %s68
    %p82 = scmp.eq.s32.totalorder %s18, 1
    %p83 = por %p81, %p82
    %p85 = scmp.ne.s32.totalorder %s68, %s84
    %p86 = scmp.eq.s32.totalorder %s18, 0
    %p87 = por %p85, %p86
    %s88 = ssub.s32 %s19, %s31
    %p89 = scmp.eq.s32.totalorder %s88, 0
    %s91 = sadd.s32 %s90, 1
    %s92 = scalar_select %p89, %s90, %s91
    %p95 = pneg %p89
    %p96 = scmp.eq.s32.totalorder %s12, 1
    %p97 = por %p95, %p96
    %p98 = scmp.ne.s32.totalorder %s90, %s93
    %p99 = scmp.eq.s32.totalorder %s12, 0
    %p100 = por %p98, %p99
    %p101 = scmp.ne.s32.totalorder %s90, %s93
    %p102 = scmp.eq.s32.totalorder %s17, 1
    %p103 = por %p101, %p102
    %p104 = scmp.ne.s32.totalorder %s93, %s94
    %p105 = scmp.eq.s32.totalorder %s17, 0
    %p106 = por %p104, %p105
    %p107 = scmp.ne.s32.totalorder %s93, %s94
    %p108 = scmp.eq.s32.totalorder %s18, 1
    %p109 = por %p107, %p108
    %p111 = scmp.ne.s32.totalorder %s94, %s110
    %p112 = scmp.eq.s32.totalorder %s18, 0
    %p113 = por %p111, %p112
    %s114 = ssub.s32 %s19, %s31
    %p115 = scmp.eq.s32.totalorder %s114, 0
    %s117 = sadd.s32 %s116, 1
    %s118 = scalar_select %p115, %s116, %s117
    %p121 = pneg %p115
    %p122 = scmp.eq.s32.totalorder %s12, 1
    %p123 = por %p121, %p122
    %p124 = scmp.ne.s32.totalorder %s116, %s119
    %p125 = scmp.eq.s32.totalorder %s12, 0
    %p126 = por %p124, %p125
    %p127 = scmp.ne.s32.totalorder %s116, %s119
    %p128 = scmp.eq.s32.totalorder %s17, 1
    %p129 = por %p127, %p128
    %p130 = scmp.ne.s32.totalorder %s119, %s120
    %p131 = scmp.eq.s32.totalorder %s17, 0
    %p132 = por %p130, %p131
    %p133 = scmp.ne.s32.totalorder %s119, %s120
    %p134 = scmp.eq.s32.totalorder %s18, 1
    %p135 = por %p133, %p134
    %p137 = scmp.ne.s32.totalorder %s120, %s136
    %p138 = scmp.eq.s32.totalorder %s18, 0
    %p139 = por %p137, %p138
    %s140 = ssub.s32 %s19, %s31
    %p141 = scmp.eq.s32.totalorder %s140, 0
    %s143 = sadd.s32 %s142, 1
    %s144 = scalar_select %p141, %s142, %s143
    %p147 = pneg %p141
    %p148 = scmp.eq.s32.totalorder %s12, 1
    %p149 = por %p147, %p148
    %p150 = scmp.ne.s32.totalorder %s142, %s145
    %p151 = scmp.eq.s32.totalorder %s12, 0
    %p152 = por %p150, %p151
    %p153 = scmp.ne.s32.totalorder %s142, %s145
    %p154 = scmp.eq.s32.totalorder %s17, 1
    %p155 = por %p153, %p154
    %p156 = scmp.ne.s32.totalorder %s145, %s146
    %p157 = scmp.eq.s32.totalorder %s17, 0
    %p158 = por %p156, %p157
    %p159 = scmp.ne.s32.totalorder %s145, %s146
    %p160 = scmp.eq.s32.totalorder %s18, 1
    %p161 = por %p159, %p160
    %p163 = scmp.ne.s32.totalorder %s146, %s162
    %p164 = scmp.eq.s32.totalorder %s18, 0
    %p165 = por %p163, %p164
    %s166 = ssub.s32 %s19, %s31
    %p167 = scmp.eq.s32.totalorder %s166, 0
    %s169 = sadd.s32 %s168, 1
    %s170 = scalar_select %p167, %s168, %s169
    %p173 = pneg %p167
    %p174 = scmp.eq.s32.totalorder %s12, 1
    %p175 = por %p173, %p174
    %p176 = scmp.ne.s32.totalorder %s168, %s171
    %p177 = scmp.eq.s32.totalorder %s12, 0
    %p178 = por %p176, %p177
    %p179 = scmp.ne.s32.totalorder %s168, %s171
    %p180 = scmp.eq.s32.totalorder %s17, 1
    %p181 = por %p179, %p180
    %p182 = scmp.ne.s32.totalorder %s171, %s172
    %p183 = scmp.eq.s32.totalorder %s17, 0
    %p184 = por %p182, %p183
    %p185 = scmp.ne.s32.totalorder %s171, %s172
    %p186 = scmp.eq.s32.totalorder %s18, 1
    %p187 = por %p185, %p186
    %p189 = scmp.ne.s32.totalorder %s172, %s188
    %p190 = scmp.eq.s32.totalorder %s18, 0
    %p191 = por %p189, %p190
    %p192 = scmp.le.s32.totalorder 1, %s12
    %p193 = scmp.lt.s32.totalorder %s12, 3
    %p194 = pnand %p192, %p193
    %p195 = pneg %p194
    // Predicated region
    $region9: #{dice_focal.1} parent=5 // pred_check
      _
    $region10: #{dice_focal.1} parent=5 // pred_check_branch
      %197 = sbr.rel (%p194) target = $region12
    $region11: #{dice_focal.1} parent=5 // pred_region
      %s198 = ssub.s32 %s12, 1
    $region12: #{dice_focal.1} parent=5 // pred_fallthru
      _
    %p199 = scmp.lt.s32.totalorder %s12, 2
    // Predicated region
    $region13: #{dice_focal.1} parent=5 // pred_check
      %p200 = pneg %p199
    $region14: #{dice_focal.1} parent=5 // pred_check_branch
      %202 = sbr.rel (%p200) target = $region16
    $region15: #{dice_focal.1} parent=5 // pred_region
      // Predicated region
      $region17: #{dice_focal.1} parent=15 // pred_check
        %p203 = pneg %p46
      $region18: #{dice_focal.1} parent=15 // pred_check_branch
        %205 = sbr.rel (%p203) target = $region20
      $region19: #{dice_focal.1} parent=15 // pred_region
        %s206 = smul.u32 2, %s20
        %p207 = scmp.lt.s32.totalorder %s19, 1
        %s208 = scalar_select %p207, %s19, 1
        %p209 = scmp.lt.s32.totalorder %s206, 1
        %s210 = scalar_select %p209, %s206, 1
        %s211 = smul.addr %s208, 2
        %s212 = sadd.s32 %s210, %s211
        %s213 = smul.addr %s212, 4
        %s214 = scalar_lea.vmem %s0, %s213
        %s215 = smul.u32 2, %s20
      $region20: #{dice_focal.1} parent=15 // pred_fallthru
        _
      // Predicated region
      $region21: #{dice_focal.1} parent=15 // pred_check
        %p216 = pneg %p74
      $region22: #{dice_focal.1} parent=15 // pred_check_branch
        %218 = sbr.rel (%p216) target = $region24
      $region23: #{dice_focal.1} parent=15 // pred_region
        %s219 = smul.u32 2, %s20
        %p220 = scmp.lt.s32.totalorder %s19, 1
        %s221 = scalar_select %p220, %s19, 1
        %p222 = scmp.lt.s32.totalorder %s219, 1
        %s223 = scalar_select %p222, %s219, 1
        %s224 = smul.addr %s221, 2
        %s225 = sadd.s32 %s223, %s224
        %s226 = scalar_lea.vmem %s1, %s225
        %s227 = smul.u32 2, %s20
      $region24: #{dice_focal.1} parent=15 // pred_fallthru
        _
    $region16: #{dice_focal.1} parent=5 // pred_fallthru
      _
    %p228 = scmp.le.s32.totalorder 1, %s12
    %p229 = scmp.lt.s32.totalorder %s12, 3
    %p230 = pnand %p228, %p229
    %p231 = pneg %p230
    // Predicated region
    $region25: #{dice_focal.1} parent=5 // pred_check
      _
    $region26: #{dice_focal.1} parent=5 // pred_check_branch
      %233 = sbr.rel (%p230) target = $region28
    $region27: #{dice_focal.1} parent=5 // pred_region
      %s234 = ssub.s32 %s12, 1
      %s235 = smul.u32 2, %s22
      %p236 = scmp.lt.s32.totalorder %s21, 1
      %s237 = scalar_select %p236, %s21, 1
      %p238 = scmp.lt.s32.totalorder %s235, 1
      %s239 = scalar_select %p238, %s235, 1
      %s240 = smul.addr %s237, 2
      %s241 = sadd.s32 %s239, %s240
      %s242 = smul.addr %s241, 4
      %s243 = scalar_lea.vmem %s0, %s242
      %p244 = pneg %p52
      %p245 = pneg %p49
      %s246 = smul.u32 2, %s22
      %p247 = scmp.lt.s32.totalorder %s21, 1
      %s248 = scalar_select %p247, %s21, 1
      %p249 = scmp.lt.s32.totalorder %s246, 1
      %s250 = scalar_select %p249, %s246, 1
      %s251 = smul.addr %s248, 2
      %s252 = sadd.s32 %s250, %s251
      %s253 = scalar_lea.vmem %s1, %s252
      %p254 = pneg %p80
      %p255 = pneg %p77
      %p256 = pneg %p106
      %p257 = pneg %p103
      %p258 = scmp.lt.s32.totalorder %s21, 1
      %s259 = scalar_select %p258, %s21, 1
      %s260 = scalar_lea.vmem %s2, %s259
      %p261 = pneg %p132
      %p262 = pneg %p129
      %p263 = scmp.lt.s32.totalorder %s21, 1
      %s264 = scalar_select %p263, %s21, 1
      %s265 = scalar_lea.vmem %s3, %s264
      %p266 = pneg %p158
      %p267 = pneg %p155
      %p268 = scmp.lt.s32.totalorder %s21, 1
      %s269 = scalar_select %p268, %s21, 1
      %s270 = scalar_lea.vmem %s4, %s269
      %p271 = pneg %p184
      %p272 = pneg %p181
      %p273 = scmp.lt.s32.totalorder %s21, 1
      %s274 = scalar_select %p273, %s21, 1
      %s275 = scalar_lea.vmem %s5, %s274
      %s276 = smul.u32 2, %s22
      %p277 = scmp.lt.s32.totalorder %s21, 1
      %s278 = scalar_select %p277, %s21, 1
      %p279 = scmp.lt.s32.totalorder %s276, 1
      %s280 = scalar_select %p279, %s276, 1
      %s281 = smul.addr %s278, 2
      %s282 = sadd.s32 %s280, %s281
      %s283 = smul.addr %s282, 4
      %s284 = scalar_lea.vmem %s0, %s283
      %s285 = smul.u32 2, %s22
      %s286 = smul.u32 2, %s22
      %p287 = scmp.lt.s32.totalorder %s21, 1
      %s288 = scalar_select %p287, %s21, 1
      %p289 = scmp.lt.s32.totalorder %s286, 1
      %s290 = scalar_select %p289, %s286, 1
      %s291 = smul.addr %s288, 2
      %s292 = sadd.s32 %s290, %s291
      %s293 = scalar_lea.vmem %s1, %s292
      %s294 = smul.u32 2, %s22
      %p295 = scmp.lt.s32.totalorder %s21, 1
      %s296 = scalar_select %p295, %s21, 1
      %s297 = scalar_lea.vmem %s2, %s296
      %p298 = scmp.lt.s32.totalorder %s21, 1
      %s299 = scalar_select %p298, %s21, 1
      %s300 = scalar_lea.vmem %s3, %s299
      %p301 = scmp.lt.s32.totalorder %s21, 1
      %s302 = scalar_select %p301, %s21, 1
      %s303 = scalar_lea.vmem %s4, %s302
      %p304 = scmp.lt.s32.totalorder %s21, 1
      %s305 = scalar_select %p304, %s21, 1
      %s306 = scalar_lea.vmem %s5, %s305
      %v307 = vld [vmem:[%s284] sm:$0xff]
      %v308 = vld [vmem:[%s293] sm:$0x3]
      %v310 = vcombine.high %v307, %v307
      %vm312 = vcmask 1043456
      %v313 = vsel %vm312, %v307, -inf
      %v314 = vrot.slane %v313, 4
      %v315 = vmax.f32 %v313, %v314
      %v316 = vrot.slane %v315, 2
      %v317 = vmax.f32 %v315, %v316
      %v318 = vrot.slane %v317, 1
      %v319 = vmax.f32 %v317, %v318
      %v320 = vsel %vm312, %v310, -inf
      %v321 = vrot.slane %v320, 4
      %v322 = vmax.f32 %v320, %v321
      %v323 = vrot.slane %v322, 2
      %v324 = vmax.f32 %v322, %v323
      %v325 = vrot.slane %v324, 1
      %v326 = vmax.f32 %v324, %v325
      %v329 = vcombine.low %v319, %v326
      %v331 = vsub.f32 %v307, %v329
      %v332 = vmul.f32 %v331, 1.442695
      %v333 = vpow.pop %v332
      %v335 = vcombine.high %v333, %v333
      %v337 = vsel %vm312, %v333, 0.0
      %v338 = vrot.slane %v337, 4
      %v339 = vadd.f32 %v337, %v338
      %v340 = vrot.slane %v339, 2
      %v341 = vadd.f32 %v339, %v340
      %v342 = vrot.slane %v341, 1
      %v343 = vadd.f32 %v341, %v342
      %v344 = vsel %vm312, %v335, 0.0
      %v345 = vrot.slane %v344, 4
      %v346 = vadd.f32 %v344, %v345
      %v347 = vrot.slane %v346, 2
      %v348 = vadd.f32 %v346, %v347
      %v349 = vrot.slane %v348, 1
      %v350 = vadd.f32 %v348, %v349
      %v351 = vrcp.pop %v343
      %v352 = vrcp.pop %v350
      %v355 = vcombine.low %v351, %v352
      %v357 = vmul.f32 %v333, %v355
      %v358 = vadd.f32 %v357, 1e-10
      %v360 = vcombine.high %v358, %v358
      %v362 = vsel %vm312, %v358, -inf
      %v363 = vrot.slane %v362, 4
      %v364 = vmax.f32 %v362, %v363
      %v365 = vrot.slane %v364, 2
      %v366 = vmax.f32 %v364, %v365
      %v367 = vrot.slane %v366, 1
      %v368 = vmax.f32 %v366, %v367
      %v369 = vsel %vm312, %v360, -inf
      %v370 = vrot.slane %v369, 4
      %v371 = vmax.f32 %v369, %v370
      %v372 = vrot.slane %v371, 2
      %v373 = vmax.f32 %v371, %v372
      %v374 = vrot.slane %v373, 1
      %v375 = vmax.f32 %v373, %v374
      %v378 = vcombine.low %v368, %v375
      %v380 = vsub.f32 %v358, %v378
      %v381 = vmul.f32 %v380, 1.442695
      %v382 = vpow.pop %v381
      %v384 = vcombine.high %v382, %v382
      %v386 = vsel %vm312, %v382, 0.0
      %v387 = vrot.slane %v386, 4
      %v388 = vadd.f32 %v386, %v387
      %v389 = vrot.slane %v388, 2
      %v390 = vadd.f32 %v388, %v389
      %v391 = vrot.slane %v390, 1
      %v392 = vadd.f32 %v390, %v391
      %v393 = vsel %vm312, %v384, 0.0
      %v394 = vrot.slane %v393, 4
      %v395 = vadd.f32 %v393, %v394
      %v396 = vrot.slane %v395, 2
      %v397 = vadd.f32 %v395, %v396
      %v398 = vrot.slane %v397, 1
      %v399 = vadd.f32 %v397, %v398
      %v400 = vrcp.pop %v392
      %v401 = vrcp.pop %v399
      %v404 = vcombine.low %v400, %v401
      %v406 = vmul.f32 %v382, %v404
      %v407 = vlog2.pop %v392
      %v408 = vmul.f32 %v407, 0.6931472
      %v409 = vlog2.pop %v399
      %v410 = vmul.f32 %v409, 0.6931472
      %v413 = vcombine.low %v408, %v410
      %v415 = vsub.f32 %v380, %v413
      %v416 = vlaneseq
      %v417 = vshrl.u32 %v416, 7
      %v418 = vlaneseq
      %v419 = vshrl.u32 %v418, 7
      %v420 = vsub.s32 0, %v419
      %v421 = vrot.slane %v308, %v420
      %v422 = vlaneseq
      %v423 = vshrl.u32 %v422, 7
      %v424 = vsub.s32 1, %v423
      %v425 = vrot.slane %v308, %v424
      %vm426 = vcmp.eq.s32.totalorder %v417, %v421
      %vm427 = vcmp.eq.s32.totalorder %v417, %v425
      %v428 = vsel %vm426, 1.0, 0.0
      %v429 = vsel %vm427, 1.0, 0.0
      %v431 = vcombine.high %v406, %v406
      %v433 = vsel %vm312, %v406, 0.0
      %v434 = vsel %vm312, %v431, 0.0
      %v435 = vadd.f32 %v433, %v434
      %436 = vadd.xlane.f32.xlu0 %v435
      %v437 = vpop.xlane.xlu0 %436
      %v438 = vsel %vm312, %v437, 0.0
      %v439 = vrot.slane %v438, 4
      %v440 = vadd.f32 %v438, %v439
      %v441 = vrot.slane %v440, 2
      %v442 = vadd.f32 %v440, %v441
      %v443 = vrot.slane %v442, 1
      %v444 = vadd.f32 %v442, %v443
      %v447 = vcombine.low %v428, %v429
      %v449 = vmul.f32 %v406, %v447
      %v451 = vcombine.high %v449, %v449
      %v453 = vsel %vm312, %v449, 0.0
      %v454 = vsel %vm312, %v451, 0.0
      %v455 = vadd.f32 %v453, %v454
      %456 = vadd.xlane.f32.xlu0 %v455
      %v457 = vpop.xlane.xlu0 %456
      %v458 = vsel %vm312, %v457, 0.0
      %v459 = vrot.slane %v458, 4
      %v460 = vadd.f32 %v458, %v459
      %v461 = vrot.slane %v460, 2
      %v462 = vadd.f32 %v460, %v461
      %v463 = vrot.slane %v462, 1
      %v464 = vadd.f32 %v462, %v463
      %v465 = vsel %vm312, %v428, 0.0
      %v466 = vsel %vm312, %v429, 0.0
      %v467 = vadd.f32 %v465, %v466
      %468 = vadd.xlane.f32.xlu0 %v467
      %v469 = vpop.xlane.xlu0 %468
      %v470 = vsel %vm312, %v469, 0.0
      %v471 = vrot.slane %v470, 4
      %v472 = vadd.f32 %v470, %v471
      %v473 = vrot.slane %v472, 2
      %v474 = vadd.f32 %v472, %v473
      %v475 = vrot.slane %v474, 1
      %v476 = vadd.f32 %v474, %v475
      %v477 = vmul.f32 %v415, %v447
      %v479 = vcombine.high %v477, %v477
      %v481 = vsel %vm312, %v477, 0.0
      %v482 = vrot.slane %v481, 4
      %v483 = vadd.f32 %v481, %v482
      %v484 = vrot.slane %v483, 2
      %v485 = vadd.f32 %v483, %v484
      %v486 = vrot.slane %v485, 1
      %v487 = vadd.f32 %v485, %v486
      %v488 = vsel %vm312, %v479, 0.0
      %v489 = vrot.slane %v488, 4
      %v490 = vadd.f32 %v488, %v489
      %v491 = vrot.slane %v490, 2
      %v492 = vadd.f32 %v490, %v491
      %v493 = vrot.slane %v492, 1
      %v494 = vadd.f32 %v492, %v493
      %v495 = vmul.f32 %v487, 1.442695
      %v496 = vpow.pop %v495
      %v497 = vmul.f32 %v494, 1.442695
      %v498 = vpow.pop %v497
      %v499 = vsub.f32 1.0, %v496
      %v500 = vsub.f32 1.0, %v498
      %v501 = vmul.f32 %v499, %v499
      %v502 = vmul.f32 %v500, %v500
      %v503 = vsub.f32 0.0, %v501
      %v504 = vsub.f32 0.0, %v502
      %v505 = vmul.f32 %v503, %v487
      %v506 = vmul.f32 %v504, %v494
      %v507 = vadd.f32 %v505, %v506
      %508 = vadd.xlane.f32.xlu0 %v507
      %v509 = vpop.xlane.xlu0 %508
      %v510 = vadd.f32 %v509, 0.0
      %p511 = scmp.eq.s32.totalorder %s22, 0
      // Predicated region
      $region29: #{dice_focal.1} parent=27 // pred_check
        %p512 = pneg %p511
      $region30: #{dice_focal.1} parent=27 // pred_check_branch
        %514 = sbr.rel (%p512) target = $region32
      $region31: #{dice_focal.1} parent=27 // pred_region
        %515 = vst [vmem:[%s297] sm:$0x1] 0.0
        %516 = vst [vmem:[%s300] sm:$0x1] 0.0
        %517 = vst [vmem:[%s303] sm:$0x1] 0.0
        %518 = vst [vmem:[%s306] sm:$0x1] 0.0
      $region32: #{dice_focal.1} parent=27 // pred_fallthru
        _
      %v519 = vld [vmem:[%s297] sm:$0x1]
      %v520 = vadd.f32 %v519, %v464
      %521 = vst [vmem:[%s297] sm:$0x1] %v520
      %v522 = vld [vmem:[%s300] sm:$0x1]
      %v523 = vadd.f32 %v522, %v444
      %524 = vst [vmem:[%s300] sm:$0x1] %v523
      %v525 = vld [vmem:[%s303] sm:$0x1]
      %v526 = vadd.f32 %v525, %v476
      %527 = vst [vmem:[%s303] sm:$0x1] %v526
      %v528 = vld [vmem:[%s306] sm:$0x1]
      %v529 = vadd.f32 %v528, %v510
      %530 = vst [vmem:[%s306] sm:$0x1] %v529
      %p531 = scmp.lt.s32.totalorder %s21, 1
      %s532 = scalar_select %p531, %s21, 1
      %s533 = scalar_lea.vmem %s2, %s532
      %p534 = scmp.lt.s32.totalorder %s21, 1
      %s535 = scalar_select %p534, %s21, 1
      %s536 = scalar_lea.vmem %s3, %s535
      %p537 = scmp.lt.s32.totalorder %s21, 1
      %s538 = scalar_select %p537, %s21, 1
      %s539 = scalar_lea.vmem %s4, %s538
      %p540 = scmp.lt.s32.totalorder %s21, 1
      %s541 = scalar_select %p540, %s21, 1
      %s542 = scalar_lea.vmem %s5, %s541
      // Predicated region
      $region33: #{dice_focal.1} parent=27 // pred_check
        %p543 = pneg %p103
      $region34: #{dice_focal.1} parent=27 // pred_check_branch
        %545 = sbr.rel (%p543) target = $region36
      $region35: #{dice_focal.1} parent=27 // pred_region
        _
      $region36: #{dice_focal.1} parent=27 // pred_fallthru
        _
      // Predicated region
      $region37: #{dice_focal.1} parent=27 // pred_check
        %p546 = pneg %p129
      $region38: #{dice_focal.1} parent=27 // pred_check_branch
        %548 = sbr.rel (%p546) target = $region40
      $region39: #{dice_focal.1} parent=27 // pred_region
        _
      $region40: #{dice_focal.1} parent=27 // pred_fallthru
        _
      // Predicated region
      $region41: #{dice_focal.1} parent=27 // pred_check
        %p549 = pneg %p155
      $region42: #{dice_focal.1} parent=27 // pred_check_branch
        %551 = sbr.rel (%p549) target = $region44
      $region43: #{dice_focal.1} parent=27 // pred_region
        _
      $region44: #{dice_focal.1} parent=27 // pred_fallthru
        _
      // Predicated region
      $region45: #{dice_focal.1} parent=27 // pred_check
        %p552 = pneg %p181
      $region46: #{dice_focal.1} parent=27 // pred_check_branch
        %554 = sbr.rel (%p552) target = $region48
      $region47: #{dice_focal.1} parent=27 // pred_region
        _
      $region48: #{dice_focal.1} parent=27 // pred_fallthru
        _
    $region28: #{dice_focal.1} parent=5 // pred_fallthru
      _
    %p555 = scmp.le.s32.totalorder 2, %s12
    // Predicated region
    $region49: #{dice_focal.1} parent=5 // pred_check
      %p556 = pneg %p555
    $region50: #{dice_focal.1} parent=5 // pred_check_branch
      %558 = sbr.rel (%p556) target = $region52
    $region51: #{dice_focal.1} parent=5 // pred_region
      %s559 = ssub.s32 %s12, 2
      // Predicated region
      $region53: #{dice_focal.1} parent=51 // pred_check
        %p560 = pneg %p109
      $region54: #{dice_focal.1} parent=51 // pred_check_branch
        %562 = sbr.rel (%p560) target = $region56
      $region55: #{dice_focal.1} parent=51 // pred_region
        %p563 = scmp.lt.s32.totalorder %s23, 1
        %s564 = scalar_select %p563, %s23, 1
        %s565 = scalar_lea.vmem %s2, %s564
      $region56: #{dice_focal.1} parent=51 // pred_fallthru
        _
      // Predicated region
      $region57: #{dice_focal.1} parent=51 // pred_check
        %p566 = pneg %p135
      $region58: #{dice_focal.1} parent=51 // pred_check_branch
        %568 = sbr.rel (%p566) target = $region60
      $region59: #{dice_focal.1} parent=51 // pred_region
        %p569 = scmp.lt.s32.totalorder %s23, 1
        %s570 = scalar_select %p569, %s23, 1
        %s571 = scalar_lea.vmem %s3, %s570
      $region60: #{dice_focal.1} parent=51 // pred_fallthru
        _
      // Predicated region
      $region61: #{dice_focal.1} parent=51 // pred_check
        %p572 = pneg %p161
      $region62: #{dice_focal.1} parent=51 // pred_check_branch
        %574 = sbr.rel (%p572) target = $region64
      $region63: #{dice_focal.1} parent=51 // pred_region
        %p575 = scmp.lt.s32.totalorder %s23, 1
        %s576 = scalar_select %p575, %s23, 1
        %s577 = scalar_lea.vmem %s4, %s576
      $region64: #{dice_focal.1} parent=51 // pred_fallthru
        _
      // Predicated region
      $region65: #{dice_focal.1} parent=51 // pred_check
        %p578 = pneg %p187
      $region66: #{dice_focal.1} parent=51 // pred_check_branch
        %580 = sbr.rel (%p578) target = $region68
      $region67: #{dice_focal.1} parent=51 // pred_region
        %p581 = scmp.lt.s32.totalorder %s23, 1
        %s582 = scalar_select %p581, %s23, 1
        %s583 = scalar_lea.vmem %s5, %s582
      $region68: #{dice_focal.1} parent=51 // pred_fallthru
        _
    $region52: #{dice_focal.1} parent=5 // pred_fallthru
      _
  $region6: #{dice_focal.1} parent=0 // loop_footer
    %s16 = sadd.s32 1, %s12
  $region7: #{dice_focal.1} parent=0 // loop_footer_branch
    %11 = sbr.rel target = $region3
  $region8: #{dice_focal.1} parent=0 // loop_exit
    _

</llo_original>
